<compile_context>
chip_gen: v6e
topology: v6e:2x2x1
jax: 0.10.0
libtpu: 0.0.40
codegen_flags: <defaults>
</compile_context>

<pallas_src>
import functools

import jax
import jax.numpy as jnp
import numpy as np
from jax.experimental import pallas as pl
from jax.experimental.pallas import tpu as pltpu

LATENT_DIM = 32
VISUAL_ENCODE_LEN = 128
IN_FEATURES = VISUAL_ENCODE_LEN + LATENT_DIM   # 160
HIDDEN1 = 64
HIDDEN2 = 32
HEAD_PAD = 128     # 3 * HIDDEN2 = 96, padded to a full lane tile
OUT_PAD = 16       # 4 + 3 + 3 = 10, padded to 16 (single fused output slab)

ROT_N, POS_N, FORCE_N = 4, 3, 3


def _round_up(x, m):
    return ((x + m - 1) // m) * m


# --------------------------------------------------------------------------
# Kernel
# --------------------------------------------------------------------------
def decoder_kernel(x_ref, fcw_ref, fcb_ref, w1_ref, b1_ref, w2_ref, b2_ref,
                   out_ref):
    # Matmul operands in the packed weights' dtype (f32 by default, bf16 if the
    # caller packed bf16 weights); accumulation + epilogue always f32.
    wdt = fcw_ref.dtype
    x = x_ref[...].astype(wdt)                                        # (TB, 160)

    # h = relu(fc_1(x))
    h = jnp.dot(x, fcw_ref[...], preferred_element_type=jnp.float32) + fcb_ref[...]
    h = jnp.maximum(h, 0.0)                                           # (TB, 64) f32

    # Fused first head layer (all three heads side by side, zero-padded to 128)
    h1 = jnp.dot(h.astype(wdt), w1_ref[...],
                 preferred_element_type=jnp.float32) + b1_ref[...]
    h1 = jnp.maximum(h1, 0.0)                                         # (TB, 128)

    # Fused second head layer (block-diagonal) -> raw logits slab (TB, 16)
    y = jnp.dot(h1.astype(wdt), w2_ref[...],
                preferred_element_type=jnp.float32) + b2_ref[...]

    col = jax.lax.broadcasted_iota(jnp.int32, y.shape, 1)
    is_rot = col < ROT_N
    is_pos = (col >= ROT_N) & (col < ROT_N + POS_N)
    is_force = (col >= ROT_N + POS_N) & (col < ROT_N + POS_N + FORCE_N)
    is_sm = is_pos | is_force                     # combined softmax lanes

    # rotation: F.normalize(dim=1) (p=2) == v / max(||v||, 1e-12)
    #                                    == v * rsqrt(max(sum_sq, 1e-24))
    ss = jnp.sum(jnp.where(is_rot, y * y, 0.0), axis=1, keepdims=True)
    rot_scale = jax.lax.rsqrt(jnp.maximum(ss, 1e-24))

    # Merged segmented softmax: one shared per-row max over point|force lanes
    # (softmax is shift-invariant per row -> exact), one exp, two masked sums.
    z = jnp.where(is_sm, y, -jnp.inf)
    m = jnp.max(z, axis=1, keepdims=True)
    e = jnp.exp(z - m)                            # zero outside softmax lanes
    s_pos = jnp.sum(jnp.where(is_pos, e, 0.0), axis=1, keepdims=True)
    s_force = jnp.sum(jnp.where(is_force, e, 0.0), axis=1, keepdims=True)

    # Blended epilogue: exact reciprocals on the EUP slot instead of VPU divides,
    # then a single where-chain + one multiply for the store.
    r_pos = pl.reciprocal(s_pos)
    r_force = pl.reciprocal(s_force)
    scale = jnp.where(is_rot, rot_scale, jnp.where(is_pos, r_pos, r_force))
    out_ref[...] = jnp.where(is_rot, y, e) * scale


# --------------------------------------------------------------------------
# Parameter construction / packing (PyTorch-layout params, packed once on host)
# --------------------------------------------------------------------------
def _init_linear(key, fan_in, fan_out):
    """PyTorch nn.Linear default init: U(-1/sqrt(fan_in), 1/sqrt(fan_in)).

    Returns (w, b) with w as [fan_in, fan_out] (ready for x @ w), b as [1, fan_out].
    """
    kw, kb = jax.random.split(key)
    bound = 1.0 / np.sqrt(fan_in)
    w = jax.random.uniform(kw, (fan_in, fan_out), jnp.float32, -bound, bound)
    b = jax.random.uniform(kb, (1, fan_out), jnp.float32, -bound, bound)
    return w, b


def make_params(key):
    keys = jax.random.split(key, 7)
    fc_w, fc_b = _init_linear(keys[0], IN_FEATURES, HIDDEN1)
    rw1, rb1 = _init_linear(keys[1], HIDDEN1, HIDDEN2)
    rw2, rb2 = _init_linear(keys[2], HIDDEN2, ROT_N)
    pw1, pb1 = _init_linear(keys[3], HIDDEN1, HIDDEN2)
    pw2, pb2 = _init_linear(keys[4], HIDDEN2, POS_N)
    fw1, fb1 = _init_linear(keys[5], HIDDEN1, HIDDEN2)
    fw2, fb2 = _init_linear(keys[6], HIDDEN2, FORCE_N)
    return (fc_w, fc_b, rw1, rb1, rw2, rb2, pw1, pb1, pw2, pb2, fw1, fb1, fw2, fb2)


def pack_params(raw, *, matmul_dtype=jnp.float32):
    """Pack the 14 PyTorch-layout params into 6 lane-padded arrays.

    matmul_dtype=jnp.bfloat16 casts only the matmul *weight* operands (biases
    and the whole epilogue stay f32).  bf16 will not meet a 1e-5 tolerance
    against the f32 reference -- it is an accuracy/throughput tradeoff.
    """
    (fc_w, fc_b, rw1, rb1, rw2, rb2, pw1, pb1, pw2, pb2, fw1, fb1, fw2, fb2) = raw
    H2 = HIDDEN2

    # First head layer: concat along the output axis, zero-pad to 128 lanes.
    w1_all = jnp.zeros((HIDDEN1, HEAD_PAD), jnp.float32)
    w1_all = w1_all.at[:, 0:H2].set(rw1)
    w1_all = w1_all.at[:, H2:2 * H2].set(pw1)
    w1_all = w1_all.at[:, 2 * H2:3 * H2].set(fw1)
    b1_all = jnp.zeros((1, HEAD_PAD), jnp.float32)
    b1_all = b1_all.at[:, 0:H2].set(rb1)
    b1_all = b1_all.at[:, H2:2 * H2].set(pb1)
    b1_all = b1_all.at[:, 2 * H2:3 * H2].set(fb1)

    # Second head layer: block diagonal (off-diagonal blocks exactly zero).
    w2_all = jnp.zeros((HEAD_PAD, OUT_PAD), jnp.float32)
    w2_all = w2_all.at[0:H2, 0:ROT_N].set(rw2)
    w2_all = w2_all.at[H2:2 * H2, ROT_N:ROT_N + POS_N].set(pw2)
    w2_all = w2_all.at[2 * H2:3 * H2, ROT_N + POS_N:ROT_N + POS_N + FORCE_N].set(fw2)
    b2_all = jnp.zeros((1, OUT_PAD), jnp.float32)
    b2_all = b2_all.at[:, 0:ROT_N].set(rb2)
    b2_all = b2_all.at[:, ROT_N:ROT_N + POS_N].set(pb2)
    b2_all = b2_all.at[:, ROT_N + POS_N:ROT_N + POS_N + FORCE_N].set(fb2)

    return (fc_w.astype(matmul_dtype), fc_b,
            w1_all.astype(matmul_dtype), b1_all,
            w2_all.astype(matmul_dtype), b2_all)


# --------------------------------------------------------------------------
# Wrapper
# --------------------------------------------------------------------------
@functools.partial(jax.jit, static_argnames=("block_batch",))
def decoder_forward(x, packed, *, block_batch=2048):
    """Run the fused decoder kernel. Returns (rotation, point, force)."""
    fc_w, fc_b, w1_all, b1_all, w2_all, b2_all = packed
    batch, in_feat = x.shape

    # Batch tile: multiple of 8 sublanes.  Target >= ~4 grid steps at large
    # batch so the "parallel" axis can shard across v7x's two TensorCores,
    # while tiles up to block_batch keep DMAs bandwidth-efficient on v5e/v6e.
    # No jnp.pad: Pallas handles the ragged last block (all math is row-wise,
    # edge stores are masked), so x never takes an extra HBM pass.
    tb = min(block_batch, max(8, _round_up(pl.cdiv(batch, 4), 8)))
    grid = (pl.cdiv(batch, tb),)

    const = lambda i: (0, 0)  # weights stay VMEM-resident across grid steps
    n_weight_elems = sum(int(np.prod(p.shape)) for p in packed)
    cost = pl.CostEstimate(
        flops=2 * batch * (in_feat * HIDDEN1 + HIDDEN1 * HEAD_PAD + HEAD_PAD * OUT_PAD),
        transcendentals=14 * batch,  # ~10 active exps + rsqrt + 2 reciprocals per row
        bytes_accessed=int(x.dtype.itemsize) * batch * in_feat
                       + 4 * batch * OUT_PAD
                       + int(fc_w.dtype.itemsize) * n_weight_elems,
    )

    out = pl.pallas_call(
        decoder_kernel,
        out_shape=jax.ShapeDtypeStruct((batch, OUT_PAD), jnp.float32),
        grid_spec=pltpu.PrefetchScalarGridSpec(
            num_scalar_prefetch=0,
            grid=grid,
            in_specs=[
                pl.BlockSpec((tb, in_feat), lambda i: (i, 0)),   # x: tiled over batch
                pl.BlockSpec(fc_w.shape, const),
                pl.BlockSpec(fc_b.shape, const),
                pl.BlockSpec(w1_all.shape, const),
                pl.BlockSpec(b1_all.shape, const),
                pl.BlockSpec(w2_all.shape, const),
                pl.BlockSpec(b2_all.shape, const),
            ],
            out_specs=pl.BlockSpec((tb, OUT_PAD), lambda i: (i, 0)),
        ),
        compiler_params=pltpu.CompilerParams(
            dimension_semantics=("parallel",),     # shard batch tiles across TCs (v7x)
            vmem_limit_bytes=32 * 1024 * 1024,     # v5e default scoped VMEM is only 16 MiB
        ),
        cost_estimate=cost,
    )(x, fc_w, fc_b, w1_all, b1_all, w2_all, b2_all)

    rotation = out[:, 0:ROT_N]
    point = out[:, ROT_N:ROT_N + POS_N]
    force = out[:, ROT_N + POS_N:ROT_N + POS_N + FORCE_N]
    return rotation, point, force


# --------------------------------------------------------------------------
# Pure-JAX reference (identical to the PyTorch forward semantics;
# F.normalize(rotation, dim=1) is the default p=2, i.e. L2 over dim 1)
# --------------------------------------------------------------------------
def decoder_forward_ref(x, raw):
    (fc_w, fc_b, rw1, rb1, rw2, rb2, pw1, pb1, pw2, pb2, fw1, fb1, fw2, fb2) = raw
    h = jnp.maximum(x @ fc_w + fc_b, 0.0)

    rot = jnp.maximum(h @ rw1 + rb1, 0.0) @ rw2 + rb2
    rot = rot / jnp.maximum(jnp.linalg.norm(rot, axis=1, keepdims=True), 1e-12)

    pos = jax.nn.softmax(jnp.maximum(h @ pw1 + pb1, 0.0) @ pw2 + pb2, axis=1)
    force = jax.nn.softmax(jnp.maximum(h @ fw1 + fb1, 0.0) @ fw2 + fb2, axis=1)
    return rot, pos, force


if __name__ == "__main__":
    key = jax.random.PRNGKey(0)
    kx, kp = jax.random.split(key)

    raw_params = make_params(kp)
    packed_params = pack_params(raw_params)   # f32 matmuls: meets the 1e-5 check

    # batch=8 exercises the even-tile path; batch=13 the ragged (un-padded)
    # last block that replaces the old jnp.pad path.
    for batch in (8, 13):
        x = jax.random.normal(jax.random.fold_in(kx, batch),
                              (batch, IN_FEATURES), jnp.float32)

        rot, pos, force = decoder_forward(x, packed_params)
        jax.block_until_ready((rot, pos, force))

        rot_r, pos_r, force_r = decoder_forward_ref(x, raw_params)
        np.testing.assert_allclose(np.asarray(rot), np.asarray(rot_r), rtol=1e-5, atol=1e-5)
        np.testing.assert_allclose(np.asarray(pos), np.asarray(pos_r), rtol=1e-5, atol=1e-5)
        np.testing.assert_allclose(np.asarray(force), np.asarray(force_r), rtol=1e-5, atol=1e-5)

    print("KERNEL_OK")
</pallas_src>

<mosaic_0001>
module attributes {stable_mosaic.version = 11 : i64} {
  func.func @decoder_kernel(%arg0: i32, %arg1: memref<8x160xf32, #tpu.memory_space<vmem>>, %arg2: memref<160x64xf32, #tpu.memory_space<vmem>>, %arg3: memref<1x64xf32, #tpu.memory_space<vmem>>, %arg4: memref<64x128xf32, #tpu.memory_space<vmem>>, %arg5: memref<1x128xf32, #tpu.memory_space<vmem>>, %arg6: memref<128x16xf32, #tpu.memory_space<vmem>>, %arg7: memref<1x16xf32, #tpu.memory_space<vmem>>, %arg8: memref<8x16xf32, #tpu.memory_space<vmem>>) attributes {dimension_semantics = [#tpu.dimension_semantics<parallel>], iteration_bounds = array<i64: 1>, scalar_prefetch = 0 : i64, scratch_operands = 0 : i64, tpu.core_type = #tpu.core_type<tc>, window_params = [{transform_indices = @transform_0, window_bounds = array<i64: 8, 160>}, {pipeline_mode = #tpu.pipeline_mode<synchronous>, transform_indices = @transform_1, window_bounds = array<i64: 160, 64>}, {pipeline_mode = #tpu.pipeline_mode<synchronous>, transform_indices = @transform_2, window_bounds = array<i64: 1, 64>}, {pipeline_mode = #tpu.pipeline_mode<synchronous>, transform_indices = @transform_3, window_bounds = array<i64: 64, 128>}, {pipeline_mode = #tpu.pipeline_mode<synchronous>, transform_indices = @transform_4, window_bounds = array<i64: 1, 128>}, {pipeline_mode = #tpu.pipeline_mode<synchronous>, transform_indices = @transform_5, window_bounds = array<i64: 128, 16>}, {pipeline_mode = #tpu.pipeline_mode<synchronous>, transform_indices = @transform_6, window_bounds = array<i64: 1, 16>}, {transform_indices = @transform_7, window_bounds = array<i64: 8, 16>}]} {
    %c0 = arith.constant 0 : index
    %c0_0 = arith.constant 0 : index
    %0 = vector.load %arg1[%c0, %c0_0] : memref<8x160xf32, #tpu.memory_space<vmem>>, vector<8x160xf32>
    %c0_1 = arith.constant 0 : index
    %c0_2 = arith.constant 0 : index
    %1 = vector.load %arg2[%c0_1, %c0_2] : memref<160x64xf32, #tpu.memory_space<vmem>>, vector<160x64xf32>
    %cst = arith.constant dense<0.000000e+00> : vector<8x64xf32>
    %2 = tpu.matmul %0, %1, %cst {dimension_numbers = #tpu.dot_dimension_numbers<[1], [0], [0], [1], [0, 0, 1, 1], [], []>} : vector<8x160xf32>, vector<160x64xf32>, vector<8x64xf32> -> vector<8x64xf32>
    %c0_3 = arith.constant 0 : index
    %c0_4 = arith.constant 0 : index
    %3 = vector.load %arg3[%c0_3, %c0_4] : memref<1x64xf32, #tpu.memory_space<vmem>>, vector<1x64xf32>
    %4 = vector.broadcast %3 : vector<1x64xf32> to vector<8x64xf32>
    %5 = arith.addf %2, %4 : vector<8x64xf32>
    %cst_5 = arith.constant 0.000000e+00 : f32
    %6 = vector.broadcast %cst_5 : f32 to vector<8x64xf32>
    %7 = arith.maximumf %5, %6 : vector<8x64xf32>
    %c0_6 = arith.constant 0 : index
    %c0_7 = arith.constant 0 : index
    %8 = vector.load %arg4[%c0_6, %c0_7] : memref<64x128xf32, #tpu.memory_space<vmem>>, vector<64x128xf32>
    %cst_8 = arith.constant dense<0.000000e+00> : vector<8x128xf32>
    %9 = tpu.matmul %7, %8, %cst_8 {dimension_numbers = #tpu.dot_dimension_numbers<[1], [0], [0], [1], [0, 0, 1, 1], [], []>} : vector<8x64xf32>, vector<64x128xf32>, vector<8x128xf32> -> vector<8x128xf32>
    %c0_9 = arith.constant 0 : index
    %c0_10 = arith.constant 0 : index
    %10 = vector.load %arg5[%c0_9, %c0_10] : memref<1x128xf32, #tpu.memory_space<vmem>>, vector<1x128xf32>
    %11 = vector.broadcast %10 : vector<1x128xf32> to vector<8x128xf32>
    %12 = arith.addf %9, %11 : vector<8x128xf32>
    %cst_11 = arith.constant 0.000000e+00 : f32
    %13 = vector.broadcast %cst_11 : f32 to vector<8x128xf32>
    %14 = arith.maximumf %12, %13 : vector<8x128xf32>
    %c0_12 = arith.constant 0 : index
    %c0_13 = arith.constant 0 : index
    %15 = vector.load %arg6[%c0_12, %c0_13] : memref<128x16xf32, #tpu.memory_space<vmem>>, vector<128x16xf32>
    %cst_14 = arith.constant dense<0.000000e+00> : vector<8x16xf32>
    %16 = tpu.matmul %14, %15, %cst_14 {dimension_numbers = #tpu.dot_dimension_numbers<[1], [0], [0], [1], [0, 0, 1, 1], [], []>} : vector<8x128xf32>, vector<128x16xf32>, vector<8x16xf32> -> vector<8x16xf32>
    %c0_15 = arith.constant 0 : index
    %c0_16 = arith.constant 0 : index
    %17 = vector.load %arg7[%c0_15, %c0_16] : memref<1x16xf32, #tpu.memory_space<vmem>>, vector<1x16xf32>
    %18 = vector.broadcast %17 : vector<1x16xf32> to vector<8x16xf32>
    %19 = arith.addf %16, %18 : vector<8x16xf32>
    %20 = tpu.iota {dimensions = array<i32: 1>} : vector<8x16xi32>
    %c4_i32 = arith.constant 4 : i32
    %21 = vector.broadcast %c4_i32 : i32 to vector<8x16xi32>
    %22 = arith.cmpi slt, %20, %21 : vector<8x16xi32>
    %c4_i32_17 = arith.constant 4 : i32
    %23 = vector.broadcast %c4_i32_17 : i32 to vector<8x16xi32>
    %24 = arith.cmpi sge, %20, %23 : vector<8x16xi32>
    %c7_i32 = arith.constant 7 : i32
    %25 = vector.broadcast %c7_i32 : i32 to vector<8x16xi32>
    %26 = arith.cmpi slt, %20, %25 : vector<8x16xi32>
    %27 = arith.andi %24, %26 : vector<8x16xi1>
    %c7_i32_18 = arith.constant 7 : i32
    %28 = vector.broadcast %c7_i32_18 : i32 to vector<8x16xi32>
    %29 = arith.cmpi sge, %20, %28 : vector<8x16xi32>
    %c10_i32 = arith.constant 10 : i32
    %30 = vector.broadcast %c10_i32 : i32 to vector<8x16xi32>
    %31 = arith.cmpi slt, %20, %30 : vector<8x16xi32>
    %32 = arith.andi %29, %31 : vector<8x16xi1>
    %33 = arith.ori %27, %32 : vector<8x16xi1>
    %34 = arith.mulf %19, %19 : vector<8x16xf32>
    %cst_19 = arith.constant 0.000000e+00 : f32
    %35 = vector.broadcast %cst_19 : f32 to vector<8x16xf32>
    %36 = arith.select %22, %34, %35 : vector<8x16xi1>, vector<8x16xf32>
    %cst_20 = arith.constant dense<0.000000e+00> : vector<8xf32>
    %37 = vector.multi_reduction <add>, %36, %cst_20 [1] : vector<8x16xf32> to vector<8xf32>
    %38 = vector.shape_cast %37 : vector<8xf32> to vector<8x1xf32>
    %cst_21 = arith.constant 1.000000e-24 : f32
    %39 = vector.broadcast %cst_21 : f32 to vector<8x1xf32>
    %40 = arith.maximumf %38, %39 : vector<8x1xf32>
    %41 = math.rsqrt %40 : vector<8x1xf32>
    %cst_22 = arith.constant 0xFF800000 : f32
    %42 = vector.broadcast %cst_22 : f32 to vector<8x16xf32>
    %43 = arith.select %33, %19, %42 : vector<8x16xi1>, vector<8x16xf32>
    %cst_23 = arith.constant dense<0xFF800000> : vector<8xf32>
    %44 = vector.multi_reduction <maximumf>, %43, %cst_23 [1] : vector<8x16xf32> to vector<8xf32>
    %45 = vector.shape_cast %44 : vector<8xf32> to vector<8x1xf32>
    %46 = vector.broadcast %45 : vector<8x1xf32> to vector<8x16xf32>
    %47 = arith.subf %43, %46 : vector<8x16xf32>
    %48 = math.exp %47 : vector<8x16xf32>
    %cst_24 = arith.constant 0.000000e+00 : f32
    %49 = vector.broadcast %cst_24 : f32 to vector<8x16xf32>
    %50 = arith.select %27, %48, %49 : vector<8x16xi1>, vector<8x16xf32>
    %cst_25 = arith.constant dense<0.000000e+00> : vector<8xf32>
    %51 = vector.multi_reduction <add>, %50, %cst_25 [1] : vector<8x16xf32> to vector<8xf32>
    %52 = vector.shape_cast %51 : vector<8xf32> to vector<8x1xf32>
    %cst_26 = arith.constant 0.000000e+00 : f32
    %53 = vector.broadcast %cst_26 : f32 to vector<8x16xf32>
    %54 = arith.select %32, %48, %53 : vector<8x16xi1>, vector<8x16xf32>
    %cst_27 = arith.constant dense<0.000000e+00> : vector<8xf32>
    %55 = vector.multi_reduction <add>, %54, %cst_27 [1] : vector<8x16xf32> to vector<8xf32>
    %56 = vector.shape_cast %55 : vector<8xf32> to vector<8x1xf32>
    %57 = tpu.reciprocal %52 : vector<8x1xf32> -> vector<8x1xf32>
    %58 = tpu.reciprocal %56 : vector<8x1xf32> -> vector<8x1xf32>
    %59 = vector.shape_cast %57 : vector<8x1xf32> to vector<8x1xf32>
    %60 = vector.broadcast %59 : vector<8x1xf32> to vector<8x16xf32>
    %61 = vector.shape_cast %58 : vector<8x1xf32> to vector<8x1xf32>
    %62 = vector.broadcast %61 : vector<8x1xf32> to vector<8x16xf32>
    %63 = arith.select %27, %60, %62 : vector<8x16xi1>, vector<8x16xf32>
    %64 = vector.shape_cast %41 : vector<8x1xf32> to vector<8x1xf32>
    %65 = vector.broadcast %64 : vector<8x1xf32> to vector<8x16xf32>
    %66 = arith.select %22, %65, %63 : vector<8x16xi1>, vector<8x16xf32>
    %67 = arith.select %22, %19, %48 : vector<8x16xi1>, vector<8x16xf32>
    %68 = arith.mulf %67, %66 : vector<8x16xf32>
    %c0_28 = arith.constant 0 : index
    %c0_29 = arith.constant 0 : index
    %69 = vector.load %arg8[%c0_28, %c0_29] : memref<8x16xf32, #tpu.memory_space<vmem>>, vector<8x16xf32>
    tpu.vector_store %arg8[%c0_28, %c0_29], %68 {strides = array<i32>} : memref<8x16xf32, #tpu.memory_space<vmem>>, vector<8x16xf32>,
    return
  }
  func.func @transform_0(%arg0: i32) -> (i32, i32) {
    %c0_i32 = arith.constant 0 : i32
    %c0_i32_0 = arith.constant 0 : i32
    return %arg0, %c0_i32 : i32, i32
  }
  func.func @transform_1(%arg0: i32) -> (i32, i32) {
    %c0_i32 = arith.constant 0 : i32
    %c0_i32_0 = arith.constant 0 : i32
    %c0_i32_1 = arith.constant 0 : i32
    return %c0_i32, %c0_i32_0 : i32, i32
  }
  func.func @transform_2(%arg0: i32) -> (i32, i32) {
    %c0_i32 = arith.constant 0 : i32
    %c0_i32_0 = arith.constant 0 : i32
    %c0_i32_1 = arith.constant 0 : i32
    return %c0_i32, %c0_i32_0 : i32, i32
  }
  func.func @transform_3(%arg0: i32) -> (i32, i32) {
    %c0_i32 = arith.constant 0 : i32
    %c0_i32_0 = arith.constant 0 : i32
    %c0_i32_1 = arith.constant 0 : i32
    return %c0_i32, %c0_i32_0 : i32, i32
  }
  func.func @transform_4(%arg0: i32) -> (i32, i32) {
    %c0_i32 = arith.constant 0 : i32
    %c0_i32_0 = arith.constant 0 : i32
    %c0_i32_1 = arith.constant 0 : i32
    return %c0_i32, %c0_i32_0 : i32, i32
  }
  func.func @transform_5(%arg0: i32) -> (i32, i32) {
    %c0_i32 = arith.constant 0 : i32
    %c0_i32_0 = arith.constant 0 : i32
    %c0_i32_1 = arith.constant 0 : i32
    return %c0_i32, %c0_i32_0 : i32, i32
  }
  func.func @transform_6(%arg0: i32) -> (i32, i32) {
    %c0_i32 = arith.constant 0 : i32
    %c0_i32_0 = arith.constant 0 : i32
    %c0_i32_1 = arith.constant 0 : i32
    return %c0_i32, %c0_i32_0 : i32, i32
  }
  func.func @transform_7(%arg0: i32) -> (i32, i32) {
    %c0_i32 = arith.constant 0 : i32
    %c0_i32_0 = arith.constant 0 : i32
    return %arg0, %c0_i32 : i32, i32
  }
}

</mosaic_0001>

<llo_original>
// kernel: decoder_forward.1
$region0: #{decoder_forward.1}
  #allocation0 [shape = 'u32[]', space=smem, size = 0x4, offset = 0x4, fixed_abs, tag = 'smem constant byte address 0x4 - core index']
  #allocation1 [shape = 'u32[144,128]{1,0:T(1,128)}', space=vmem, size = 0x12000, scoped, tag = 'internal scratch']
  %s0 = inlined_call_operand.vmem [shape: f32[8,160], index: 0, kind: input, shape index: {}]
  %s1 = inlined_call_operand.vmem [shape: f32[160,64], index: 1, kind: input, shape index: {}]
  %s2 = inlined_call_operand.vmem [shape: f32[1,64], index: 2, kind: input, shape index: {}]
  %s3 = inlined_call_operand.vmem [shape: f32[64,128], index: 3, kind: input, shape index: {}]
  %s4 = inlined_call_operand.vmem [shape: f32[1,128], index: 4, kind: input, shape index: {}]
  %s5 = inlined_call_operand.vmem [shape: f32[128,16], index: 5, kind: input, shape index: {}]
  %s6 = inlined_call_operand.vmem [shape: f32[1,16], index: 6, kind: input, shape index: {}]
  %s7 = inlined_call_operand.vmem [shape: f32[8,16], index: 7, kind: output, shape index: {}]
  %s8 = sld [smem:[#allocation0]]
  $region38: #{decoder_forward.1} parent=0
    _
  %s10 = ssub.s32 1, %s8
  %s11 = scalar_select 0, %s10, %s8
  // Predicated region
  $region2: #{decoder_forward.1} parent=0 // pred_check
    _
  $region3: #{decoder_forward.1} parent=0 // pred_check_branch
    %13 = sbr.rel (0) target = $region5
  $region4: #{decoder_forward.1} parent=0 // pred_region
    _
  $region5: #{decoder_forward.1} parent=0 // pred_fallthru
    _
  // Predicated region
  $region6: #{decoder_forward.1} parent=0 // pred_check
    _
  $region7: #{decoder_forward.1} parent=0 // pred_check_branch
    %15 = sbr.rel (0) target = $region9
  $region8: #{decoder_forward.1} parent=0 // pred_region
    _
  $region9: #{decoder_forward.1} parent=0 // pred_fallthru
    _
  // Predicated region
  $region10: #{decoder_forward.1} parent=0 // pred_check
    _
  $region11: #{decoder_forward.1} parent=0 // pred_check_branch
    %17 = sbr.rel (0) target = $region13
  $region12: #{decoder_forward.1} parent=0 // pred_region
    _
  $region13: #{decoder_forward.1} parent=0 // pred_fallthru
    _
  // Predicated region
  $region14: #{decoder_forward.1} parent=0 // pred_check
    _
  $region15: #{decoder_forward.1} parent=0 // pred_check_branch
    %19 = sbr.rel (0) target = $region17
  $region16: #{decoder_forward.1} parent=0 // pred_region
    _
  $region17: #{decoder_forward.1} parent=0 // pred_fallthru
    _
  // Predicated region
  $region18: #{decoder_forward.1} parent=0 // pred_check
    _
  $region19: #{decoder_forward.1} parent=0 // pred_check_branch
    %21 = sbr.rel (0) target = $region21
  $region20: #{decoder_forward.1} parent=0 // pred_region
    _
  $region21: #{decoder_forward.1} parent=0 // pred_fallthru
    _
  // Predicated region
  $region22: #{decoder_forward.1} parent=0 // pred_check
    _
  $region23: #{decoder_forward.1} parent=0 // pred_check_branch
    %23 = sbr.rel (0) target = $region25
  $region24: #{decoder_forward.1} parent=0 // pred_region
    _
  $region25: #{decoder_forward.1} parent=0 // pred_fallthru
    _
  // Predicated region
  $region26: #{decoder_forward.1} parent=0 // pred_check
    _
  $region27: #{decoder_forward.1} parent=0 // pred_check_branch
    %25 = sbr.rel (0) target = $region29
  $region28: #{decoder_forward.1} parent=0 // pred_region
    _
  $region29: #{decoder_forward.1} parent=0 // pred_fallthru
    _
  %v26 = vld [vmem:[%s0] sm:$0xff]
  %v27 = vld [vmem:[%s0 + $0x8] sm:$0xff]
  %v28 = vld [vmem:[%s1] sm:$0xff]
  %v29 = vld [vmem:[%s1 + $0x8] sm:$0xff]
  %v30 = vld [vmem:[%s1 + $0x10] sm:$0xff]
  %v31 = vld [vmem:[%s1 + $0x18] sm:$0xff]
  %v32 = vld [vmem:[%s1 + $0x20] sm:$0xff]
  %v33 = vld [vmem:[%s1 + $0x28] sm:$0xff]
  %v34 = vld [vmem:[%s1 + $0x30] sm:$0xff]
  %v35 = vld [vmem:[%s1 + $0x38] sm:$0xff]
  %v36 = vld [vmem:[%s1 + $0x40] sm:$0xff]
  %v37 = vld [vmem:[%s1 + $0x48] sm:$0xff]
  %v38 = vld [vmem:[%s1 + $0x50] sm:$0xff]
  %v39 = vld [vmem:[%s1 + $0x58] sm:$0xff]
  %v40 = vld [vmem:[%s1 + $0x60] sm:$0xff]
  %v41 = vld [vmem:[%s1 + $0x68] sm:$0xff]
  %v42 = vld [vmem:[%s1 + $0x70] sm:$0xff]
  %v43 = vld [vmem:[%s1 + $0x78] sm:$0xff]
  %v44 = vld [vmem:[%s1 + $0x80] sm:$0xff]
  %v45 = vld [vmem:[%s1 + $0x88] sm:$0xff]
  %v46 = vld [vmem:[%s1 + $0x90] sm:$0xff]
  %v47 = vld [vmem:[%s1 + $0x98] sm:$0xff]
  %v48 = vld [vmem:[%s2] sm:$0x1]
  %v50 = vlaneseq
  %v51 = vshrl.u32 %v50, 7
  %v52 = vsub.s32 0, %v51
  %v53 = vrot.slane %v48, %v52
  %vm55 = vcmask 261120
  %v57 = vsel %vm55, %v27, 0
  %59 = vmatprep.subr.mxu0 0.0
  %60 = vmatpush1.msra.mxu0 %v43
  %61 = vmatprep.subr.mxu0 0.0
  %62 = vmatpush1.msra.mxu0 %v42
  %63 = vmatprep.subr.mxu0 0.0
  %64 = vmatpush1.msra.mxu0 %v41
  %65 = vmatprep.subr.mxu0 0.0
  %66 = vmatpush1.msra.mxu0 %v40
  %67 = vmatprep.subr.mxu0 0.0
  %68 = vmatpush1.msra.mxu0 %v39
  %69 = vmatprep.subr.mxu0 0.0
  %70 = vmatpush1.msra.mxu0 %v38
  %71 = vmatprep.subr.mxu0 0.0
  %72 = vmatpush1.msra.mxu0 %v37
  %73 = vmatprep.subr.mxu0 0.0
  %74 = vmatpush1.msra.mxu0 %v36
  %75 = vmatprep.subr.mxu0 0.0
  %76 = vmatpush1.msra.mxu0 %v35
  %77 = vmatprep.subr.mxu0 0.0
  %78 = vmatpush1.msra.mxu0 %v34
  %79 = vmatprep.subr.mxu0 0.0
  %80 = vmatpush1.msra.mxu0 %v33
  %81 = vmatprep.subr.mxu0 0.0
  %82 = vmatpush1.msra.mxu0 %v32
  %83 = vmatprep.subr.mxu0 0.0
  %84 = vmatpush1.msra.mxu0 %v31
  %85 = vmatprep.subr.mxu0 0.0
  %86 = vmatpush1.msra.mxu0 %v30
  %87 = vmatprep.subr.mxu0 0.0
  %88 = vmatpush1.msra.mxu0 %v29
  %89 = vmatprep.subr.mxu0 0.0
  %90 = vmatpush1.msra.mxu0 %v28
  %91 = vmatprep.subr.mxu0 0.0
  %92 = vmatpush2.msra.mxu0 0.0
  %93 = vmatprep.subr.mxu0 0.0
  %94 = vmatpush2.msra.mxu0 0.0
  %95 = vmatprep.subr.mxu0 0.0
  %96 = vmatpush2.msra.mxu0 0.0
  %97 = vmatprep.subr.mxu0 0.0
  %98 = vmatpush2.msra.mxu0 0.0
  %99 = vmatprep.subr.mxu0 0.0
  %100 = vmatpush2.msra.mxu0 0.0
  %101 = vmatprep.subr.mxu0 0.0
  %102 = vmatpush2.msra.mxu0 0.0
  %103 = vmatprep.subr.mxu0 0.0
  %104 = vmatpush2.msra.mxu0 0.0
  %105 = vmatprep.subr.mxu0 0.0
  %106 = vmatpush2.msra.mxu0 0.0
  %107 = vmatprep.subr.mxu0 0.0
  %108 = vmatpush2.msra.mxu0 0.0
  %109 = vmatprep.subr.mxu0 0.0
  %110 = vmatpush2.msra.mxu0 0.0
  %111 = vmatprep.subr.mxu0 0.0
  %112 = vmatpush2.msra.mxu0 0.0
  %113 = vmatprep.subr.mxu0 0.0
  %114 = vmatpush2.msra.mxu0 0.0
  %115 = vmatprep.subr.mxu0 0.0
  %116 = vmatpush2.msra.mxu0 %v47
  %117 = vmatprep.subr.mxu0 0.0
  %118 = vmatpush2.msra.mxu0 %v46
  %119 = vmatprep.subr.mxu0 0.0
  %120 = vmatpush2.msra.mxu0 %v45
  %121 = vmatprep.subr.mxu0 0.0
  %122 = vmatpush2.msra.mxu0 %v44
  %123 = vmatprep.mubr.f32.mxu0 %v57
  %124 = vmatmul.mubr.f32.gmra.mxu0 %v26
  %v125 = vpop.f32.mrf.mxu0
  %v126 = vadd.f32 %v53, %v125
  %v127 = vpop.f32.mrf.mxu0
  %128 = vdwg.mxu0
  %v129 = vmax.f32 %v126, 0.0
  %v130 = vld [vmem:[%s3] sm:$0xff]
  %v131 = vld [vmem:[%s3 + $0x8] sm:$0xff]
  %v132 = vld [vmem:[%s3 + $0x10] sm:$0xff]
  %v133 = vld [vmem:[%s3 + $0x18] sm:$0xff]
  %v134 = vld [vmem:[%s3 + $0x20] sm:$0xff]
  %v135 = vld [vmem:[%s3 + $0x28] sm:$0xff]
  %v136 = vld [vmem:[%s3 + $0x30] sm:$0xff]
  %v137 = vld [vmem:[%s3 + $0x38] sm:$0xff]
  %v138 = vld [vmem:[%s4] sm:$0x1]
  %v140 = vlaneseq
  %v141 = vshrl.u32 %v140, 7
  %v142 = vsub.s32 0, %v141
  %v143 = vrot.slane %v138, %v142
  %vm145 = vcmask 523264
  %v147 = vsel %vm145, %v129, 0
  %149 = vmatprep.subr.mxu0 0.0
  %150 = vmatpush1.msra.mxu0 0.0
  %151 = vmatprep.subr.mxu0 0.0
  %152 = vmatpush1.msra.mxu0 0.0
  %153 = vmatprep.subr.mxu0 0.0
  %154 = vmatpush1.msra.mxu0 0.0
  %155 = vmatprep.subr.mxu0 0.0
  %156 = vmatpush1.msra.mxu0 0.0
  %157 = vmatprep.subr.mxu0 0.0
  %158 = vmatpush1.msra.mxu0 0.0
  %159 = vmatprep.subr.mxu0 0.0
  %160 = vmatpush1.msra.mxu0 0.0
  %161 = vmatprep.subr.mxu0 0.0
  %162 = vmatpush1.msra.mxu0 0.0
  %163 = vmatprep.subr.mxu0 0.0
  %164 = vmatpush1.msra.mxu0 0.0
  %165 = vmatprep.subr.mxu0 0.0
  %166 = vmatpush1.msra.mxu0 %v137
  %167 = vmatprep.subr.mxu0 0.0
  %168 = vmatpush1.msra.mxu0 %v136
  %169 = vmatprep.subr.mxu0 0.0
  %170 = vmatpush1.msra.mxu0 %v135
  %171 = vmatprep.subr.mxu0 0.0
  %172 = vmatpush1.msra.mxu0 %v134
  %173 = vmatprep.subr.mxu0 0.0
  %174 = vmatpush1.msra.mxu0 %v133
  %175 = vmatprep.subr.mxu0 0.0
  %176 = vmatpush1.msra.mxu0 %v132
  %177 = vmatprep.subr.mxu0 0.0
  %178 = vmatpush1.msra.mxu0 %v131
  %179 = vmatprep.subr.mxu0 0.0
  %180 = vmatpush1.msra.mxu0 %v130
  %181 = vmatprep.subr.mxu0 0.0
  %182 = vmatpush2.msra.mxu0 0.0
  %183 = vmatprep.subr.mxu0 0.0
  %184 = vmatpush2.msra.mxu0 0.0
  %185 = vmatprep.subr.mxu0 0.0
  %186 = vmatpush2.msra.mxu0 0.0
  %187 = vmatprep.subr.mxu0 0.0
  %188 = vmatpush2.msra.mxu0 0.0
  %189 = vmatprep.subr.mxu0 0.0
  %190 = vmatpush2.msra.mxu0 0.0
  %191 = vmatprep.subr.mxu0 0.0
  %192 = vmatpush2.msra.mxu0 0.0
  %193 = vmatprep.subr.mxu0 0.0
  %194 = vmatpush2.msra.mxu0 0.0
  %195 = vmatprep.subr.mxu0 0.0
  %196 = vmatpush2.msra.mxu0 0.0
  %197 = vmatprep.subr.mxu0 0.0
  %198 = vmatpush2.msra.mxu0 0.0
  %199 = vmatprep.subr.mxu0 0.0
  %200 = vmatpush2.msra.mxu0 0.0
  %201 = vmatprep.subr.mxu0 0.0
  %202 = vmatpush2.msra.mxu0 0.0
  %203 = vmatprep.subr.mxu0 0.0
  %204 = vmatpush2.msra.mxu0 0.0
  %205 = vmatprep.subr.mxu0 0.0
  %206 = vmatpush2.msra.mxu0 0.0
  %207 = vmatprep.subr.mxu0 0.0
  %208 = vmatpush2.msra.mxu0 0.0
  %209 = vmatprep.subr.mxu0 0.0
  %210 = vmatpush2.msra.mxu0 0.0
  %211 = vmatprep.subr.mxu0 0.0
  %212 = vmatpush2.msra.mxu0 0.0
  %213 = vmatprep.mubr.f32.mxu0 0.0
  %214 = vmatmul.mubr.f32.gmra.mxu0 %v147
  %v215 = vpop.f32.mrf.mxu0
  %v216 = vadd.f32 %v143, %v215
  %v217 = vpop.f32.mrf.mxu0
  %218 = vdwg.mxu0
  %v219 = vmax.f32 %v216, 0.0
  %v220 = vld [vmem:[%s5] sm:$0xff]
  %v221 = vld [vmem:[%s5 + $0x8] sm:$0xff]
  %v222 = vld [vmem:[%s5 + $0x10] sm:$0xff]
  %v223 = vld [vmem:[%s5 + $0x18] sm:$0xff]
  %v224 = vld [vmem:[%s5 + $0x20] sm:$0xff]
  %v225 = vld [vmem:[%s5 + $0x28] sm:$0xff]
  %v226 = vld [vmem:[%s5 + $0x30] sm:$0xff]
  %v227 = vld [vmem:[%s5 + $0x38] sm:$0xff]
  %v228 = vld [vmem:[%s5 + $0x40] sm:$0xff]
  %v229 = vld [vmem:[%s5 + $0x48] sm:$0xff]
  %v230 = vld [vmem:[%s5 + $0x50] sm:$0xff]
  %v231 = vld [vmem:[%s5 + $0x58] sm:$0xff]
  %v232 = vld [vmem:[%s5 + $0x60] sm:$0xff]
  %v233 = vld [vmem:[%s5 + $0x68] sm:$0xff]
  %v234 = vld [vmem:[%s5 + $0x70] sm:$0xff]
  %v235 = vld [vmem:[%s5 + $0x78] sm:$0xff]
  %v236 = vld [vmem:[%s6] sm:$0x1]
  %v238 = vlaneseq
  %v239 = vshrl.u32 %v238, 7
  %v240 = vsub.s32 0, %v239
  %v241 = vrot.slane %v236, %v240
  %243 = vmatprep.subr.mxu0 0.0
  %244 = vmatpush1.msra.mxu0 %v235
  %245 = vmatprep.subr.mxu0 0.0
  %246 = vmatpush1.msra.mxu0 %v234
  %247 = vmatprep.subr.mxu0 0.0
  %248 = vmatpush1.msra.mxu0 %v233
  %249 = vmatprep.subr.mxu0 0.0
  %250 = vmatpush1.msra.mxu0 %v232
  %251 = vmatprep.subr.mxu0 0.0
  %252 = vmatpush1.msra.mxu0 %v231
  %253 = vmatprep.subr.mxu0 0.0
  %254 = vmatpush1.msra.mxu0 %v230
  %255 = vmatprep.subr.mxu0 0.0
  %256 = vmatpush1.msra.mxu0 %v229
  %257 = vmatprep.subr.mxu0 0.0
  %258 = vmatpush1.msra.mxu0 %v228
  %259 = vmatprep.subr.mxu0 0.0
  %260 = vmatpush1.msra.mxu0 %v227
  %261 = vmatprep.subr.mxu0 0.0
  %262 = vmatpush1.msra.mxu0 %v226
  %263 = vmatprep.subr.mxu0 0.0
  %264 = vmatpush1.msra.mxu0 %v225
  %265 = vmatprep.subr.mxu0 0.0
  %266 = vmatpush1.msra.mxu0 %v224
  %267 = vmatprep.subr.mxu0 0.0
  %268 = vmatpush1.msra.mxu0 %v223
  %269 = vmatprep.subr.mxu0 0.0
  %270 = vmatpush1.msra.mxu0 %v222
  %271 = vmatprep.subr.mxu0 0.0
  %272 = vmatpush1.msra.mxu0 %v221
  %273 = vmatprep.subr.mxu0 0.0
  %274 = vmatpush1.msra.mxu0 %v220
  %275 = vmatprep.subr.mxu0 0.0
  %276 = vmatpush2.msra.mxu0 0.0
  %277 = vmatprep.subr.mxu0 0.0
  %278 = vmatpush2.msra.mxu0 0.0
  %279 = vmatprep.subr.mxu0 0.0
  %280 = vmatpush2.msra.mxu0 0.0
  %281 = vmatprep.subr.mxu0 0.0
  %282 = vmatpush2.msra.mxu0 0.0
  %283 = vmatprep.subr.mxu0 0.0
  %284 = vmatpush2.msra.mxu0 0.0
  %285 = vmatprep.subr.mxu0 0.0
  %286 = vmatpush2.msra.mxu0 0.0
  %287 = vmatprep.subr.mxu0 0.0
  %288 = vmatpush2.msra.mxu0 0.0
  %289 = vmatprep.subr.mxu0 0.0
  %290 = vmatpush2.msra.mxu0 0.0
  %291 = vmatprep.subr.mxu0 0.0
  %292 = vmatpush2.msra.mxu0 0.0
  %293 = vmatprep.subr.mxu0 0.0
  %294 = vmatpush2.msra.mxu0 0.0
  %295 = vmatprep.subr.mxu0 0.0
  %296 = vmatpush2.msra.mxu0 0.0
  %297 = vmatprep.subr.mxu0 0.0
  %298 = vmatpush2.msra.mxu0 0.0
  %299 = vmatprep.subr.mxu0 0.0
  %300 = vmatpush2.msra.mxu0 0.0
  %301 = vmatprep.subr.mxu0 0.0
  %302 = vmatpush2.msra.mxu0 0.0
  %303 = vmatprep.subr.mxu0 0.0
  %304 = vmatpush2.msra.mxu0 0.0
  %305 = vmatprep.subr.mxu0 0.0
  %306 = vmatpush2.msra.mxu0 0.0
  %307 = vmatprep.mubr.f32.mxu0 0.0
  %308 = vmatmul.mubr.f32.gmra.mxu0 %v219
  %v309 = vpop.f32.mrf.mxu0
  %v310 = vadd.f32 %v241, %v309
  %v311 = vpop.f32.mrf.mxu0
  %312 = vdwg.mxu0
  %v313 = vlaneseq
  %v314 = vand.u32 %v313, 127
  %vm315 = vcmp.lt.s32.totalorder %v314, 4
  %vm316 = vcmp.ge.s32.totalorder %v314, 4
  %vm317 = vcmp.lt.s32.totalorder %v314, 7
  %vm318 = vmand %vm316, %vm317
  %vm319 = vcmp.ge.s32.totalorder %v314, 7
  %vm320 = vcmp.lt.s32.totalorder %v314, 10
  %vm321 = vmand %vm319, %vm320
  %vm322 = vmor %vm318, %vm321
  %v323 = vmul.f32 %v310, %v310
  %v324 = vsel %vm315, %v323, 0.0
  %vm325 = vcmask 130048
  %v326 = vsel %vm325, %v324, 0.0
  %327 = vadd.xlane.f32.xlu0 %v326
  %v328 = vpop.xlane.xlu0 %327
  %v329 = vmax.f32 %v328, 1e-24
  %v330 = vrsqrt.pop %v329
  %v331 = vsel %vm322, %v310, -inf
  %v332 = vsel %vm325, %v331, -inf
  %333 = vmax.xlane.f32.xlu0 %v332
  %v334 = vpop.xlane.xlu0 %333
  %v335 = vsub.f32 %v331, %v334
  %v336 = vmul.f32 %v335, 1.442695
  %v337 = vpow.pop %v336
  %v338 = vsel %vm318, %v337, 0.0
  %v339 = vsel %vm325, %v338, 0.0
  %340 = vadd.xlane.f32.xlu0 %v339
  %v341 = vpop.xlane.xlu0 %340
  %v342 = vsel %vm321, %v337, 0.0
  %v343 = vsel %vm325, %v342, 0.0
  %344 = vadd.xlane.f32.xlu0 %v343
  %v345 = vpop.xlane.xlu0 %344
  %v346 = vrcp.pop %v341
  %v347 = vrcp.pop %v345
  %v348 = vsel %vm318, %v346, %v347
  %v349 = vsel %vm315, %v330, %v348
  %v350 = vsel %vm315, %v310, %v337
  %v351 = vmul.f32 %v350, %v349
  %352 = vst.msk [vmem:[%s7] sm:$0xff] %vm325, %v351
  // Predicated region
  $region30: #{decoder_forward.1} parent=0 // pred_check
    _
  $region31: #{decoder_forward.1} parent=0 // pred_check_branch
    %354 = sbr.rel (0) target = $region33
  $region32: #{decoder_forward.1} parent=0 // pred_region
    _
  $region33: #{decoder_forward.1} parent=0 // pred_fallthru
    _
  // Predicated region
  $region34: #{decoder_forward.1} parent=0 // pred_check
    _
  $region35: #{decoder_forward.1} parent=0 // pred_check_branch
    %356 = sbr.rel (0) target = $region37
  $region36: #{decoder_forward.1} parent=0 // pred_region
    _
  $region37: #{decoder_forward.1} parent=0 // pred_fallthru
    _

</llo_original>
